<compile_context>
chip_gen: v6e
topology: v6e:2x2x1
jax: 0.10.0
libtpu: 0.0.40
codegen_flags: <defaults>
</compile_context>

<pallas_src>
import functools

import numpy as np
import jax
import jax.numpy as jnp
from jax.experimental import pallas as pl
from jax.experimental.pallas import tpu as pltpu


def _round_up(x, m):
    return ((x + m - 1) // m) * m


def _cdiv(a, b):
    return -(-a // b)


def _select_fma(x, knots, slopes, icpts, masks=None):
    """Piecewise-linear eval with searchsorted(side='left') + clamp semantics.

    Segment s (s in [0, K-2]) wins iff x > knots[s] for the largest such s;
    ends extrapolate linearly.  The cascade selects slope/intercept constants
    (2 selects per segment) and finishes with a single mul+add.
    """
    nseg = len(slopes)
    if nseg == 1:
        return x * slopes[0] + icpts[0]
    if masks is None:
        masks = [x > knots[s] for s in range(1, nseg)]
    sl = jnp.where(masks[0], slopes[1], slopes[0])
    ic = jnp.where(masks[0], icpts[1], icpts[0])
    for s in range(2, nseg):
        sl = jnp.where(masks[s - 1], slopes[s], sl)
        ic = jnp.where(masks[s - 1], icpts[s], ic)
    return x * sl + ic


def _dynamics_kernel_shared(x_ref, mid_ref, lat_ref, rad_ref, *,
                            knots, mid_tab, lat_tab, rad_tab):
    """All three interpolators share knot speeds: one mask set, three cascades
    that directly produce long_midpoint, lat_radius, long_radius."""
    x = x_ref[...]
    nseg = len(mid_tab[0])
    masks = [x > knots[s] for s in range(1, nseg)]
    mid_ref[...] = _select_fma(x, knots, mid_tab[0], mid_tab[1], masks)
    lat_ref[...] = _select_fma(x, knots, lat_tab[0], lat_tab[1], masks)
    rad_ref[...] = _select_fma(x, knots, rad_tab[0], rad_tab[1], masks)


def _dynamics_kernel_general(x_ref, mid_ref, lat_ref, rad_ref, *,
                             b_tab, l_tab, t_tab):
    """Distinct knot speeds per interpolator."""
    x = x_ref[...]
    max_braking = _select_fma(x, *b_tab)
    max_longaccel = _select_fma(x, *l_tab)
    max_lataccel = _select_fma(x, *t_tab)
    mid = 0.5 * (max_braking + max_longaccel)
    mid_ref[...] = mid
    lat_ref[...] = max_lataccel
    rad_ref[...] = max_longaccel - mid


class DynamicsInterp:
    """JAX/Pallas port of deepracing DynamicsInterp (forward pass only)."""

    _LANES = 1024      # lane-dense column width (multiple of 128)
    _MAX_TILE_R = 256  # <= 256x1024 f32 tile: 8 MiB double-buffered, v5e-safe

    def __init__(self, braking_speeds, braking_maxvals,
                 longaccel_speeds, longaccel_maxvals,
                 lataccel_speeds, lataccel_maxvals):
        # __init__-time work (mirrors torch __init__): sort knots, precompute
        # per-segment slope & intercept so the kernel is selects + one FMA.
        def prep(xs, ys):
            xs = np.asarray(xs, dtype=np.float32)
            ys = np.asarray(ys, dtype=np.float32)
            order = np.argsort(xs, kind="stable")
            xs, ys = xs[order], ys[order]
            if xs.size < 2 or np.any(np.diff(xs) <= 0.0):
                raise ValueError(
                    "knot speeds must have >=2 entries and be strictly "
                    "increasing after sorting")
            slope = ((ys[1:] - ys[:-1]) / (xs[1:] - xs[:-1])).astype(np.float32)
            intercept = (ys[:-1] - xs[:-1] * slope).astype(np.float32)
            return xs, slope, intercept

        bk, bs, bi = prep(braking_speeds, braking_maxvals)
        lk, ls, li = prep(longaccel_speeds, longaccel_maxvals)
        tk, ts, ti = prep(lataccel_speeds, lataccel_maxvals)

        def consts(a):
            return tuple(np.float32(v) for v in a)

        shared = bool(bk.shape == lk.shape == tk.shape
                      and np.array_equal(bk, lk)
                      and np.array_equal(bk, tk))

        if shared:
            # Fold braking + longaccel into midpoint / radius tables:
            #   mid = 0.5*(b + l),  rad = l - mid = 0.5*(l - b)
            mid_s, mid_i = 0.5 * (bs + ls), 0.5 * (bi + li)
            rad_s, rad_i = 0.5 * (ls - bs), 0.5 * (li - bi)
            self._kernel = functools.partial(
                _dynamics_kernel_shared,
                knots=consts(bk),
                mid_tab=(consts(mid_s), consts(mid_i)),
                lat_tab=(consts(ts), consts(ti)),
                rad_tab=(consts(rad_s), consts(rad_i)))
        else:
            self._kernel = functools.partial(
                _dynamics_kernel_general,
                b_tab=(consts(bk), consts(bs), consts(bi)),
                l_tab=(consts(lk), consts(ls), consts(li)),
                t_tab=(consts(tk), consts(ts), consts(ti)))

        self._forward = jax.jit(self._forward_impl)

    def __call__(self, speeds_eval):
        return self._forward(speeds_eval)

    def _forward_impl(self, speeds_eval):
        f32 = jnp.float32
        shape = speeds_eval.shape
        x = jnp.ravel(speeds_eval).astype(f32)
        n = x.shape[0]

        # Lane-dense 2-D layout (rows, c), tiled over rows with minimal padding.
        c = min(self._LANES, _round_up(max(n, 1), 128))
        rows = _cdiv(n, c)

        if rows <= 8:
            ntiles, tile_r = 1, rows
        else:
            ntiles = _cdiv(rows, self._MAX_TILE_R)
            if rows >= 16:
                ntiles = max(ntiles, 2)  # keep >=2 grid steps for megacore
            tile_r = _round_up(_cdiv(rows, ntiles), 8)
            ntiles = _cdiv(rows, tile_r)
        rows_p = ntiles * tile_r

        n_pad = rows_p * c - n
        if n_pad:
            x = jnp.concatenate([x, jnp.zeros((n_pad,), f32)])
        x2d = x.reshape(rows_p, c)

        spec = pl.BlockSpec((tile_r, c), lambda i: (i, 0))
        plane = jax.ShapeDtypeStruct((rows_p, c), f32)

        mid2d, lat2d, rad2d = pl.pallas_call(
            self._kernel,
            out_shape=(plane, plane, plane),
            grid=(ntiles,),
            in_specs=[spec],
            out_specs=(spec, spec, spec),
            compiler_params=pltpu.CompilerParams(
                dimension_semantics=("parallel",)),
        )(x2d)

        def unpack(a):
            flat = a.reshape(rows_p * c)
            if n_pad:
                flat = flat[:n]
            return flat.reshape(shape)

        long_midpoint = unpack(mid2d)
        lat_radius = unpack(lat2d)
        long_radius = unpack(rad2d)

        # torch-layout origin (trailing interleaved dim of 2) — single XLA op.
        origin = jnp.stack([jnp.zeros_like(long_midpoint), long_midpoint],
                           axis=-1)
        return origin, lat_radius, long_radius


def _ref_forward(speeds, ref_tables):
    """NumPy reference with torch LinearInterpolator semantics."""
    (bx, by), (lx, ly), (tx, ty) = ref_tables

    def interp(x, xs, ys):
        idx = np.clip(np.searchsorted(xs, x, side="left"), 1, xs.size - 1)
        lo = idx - 1
        slope = (ys[lo + 1] - ys[lo]) / (xs[lo + 1] - xs[lo])
        return ys[lo] + (x - xs[lo]) * slope

    mb = interp(speeds, bx, by)
    ml = interp(speeds, lx, ly)
    mt = interp(speeds, tx, ty)
    mid = 0.5 * (mb + ml)
    origin = np.stack([np.zeros_like(mid), mid], axis=-1)
    return origin, mt, ml - mid


if __name__ == "__main__":
    key = jax.random.PRNGKey(0)

    # Deterministic synthetic interpolator tables (unsorted on purpose to
    # exercise the argsort in __init__).  K = 8 knots each.
    K = 8
    perm = np.array([3, 0, 6, 1, 7, 2, 5, 4], dtype=np.int64)
    base_speeds = np.linspace(0.0, 100.0, K, dtype=np.float32)

    braking_speeds = base_speeds[perm]
    braking_maxvals = (-30.0 - 0.08 * base_speeds)[perm].astype(np.float32)
    longaccel_speeds = base_speeds[perm]
    longaccel_maxvals = (12.0 - 0.06 * base_speeds)[perm].astype(np.float32)
    lataccel_speeds_shared = base_speeds[perm]
    lataccel_speeds_distinct = (1.1 * base_speeds + 2.0)[perm].astype(np.float32)
    lataccel_maxvals = (25.0 - 0.04 * base_speeds)[perm].astype(np.float32)

    def sorted_xy(xs, ys):
        o = np.argsort(xs)
        return xs[o], ys[o]

    configs = [
        ("shared-knots", lataccel_speeds_shared),
        ("distinct-knots", lataccel_speeds_distinct),
    ]

    for name, lat_speeds in configs:
        model = DynamicsInterp(braking_speeds, braking_maxvals,
                               longaccel_speeds, longaccel_maxvals,
                               lat_speeds, lataccel_maxvals)

        ref_tables = (sorted_xy(braking_speeds, braking_maxvals),
                      sorted_xy(longaccel_speeds, longaccel_maxvals),
                      sorted_xy(lat_speeds, lataccel_maxvals))

        # Shapes cover: single-vreg tile, ragged (padding) path, multi-tile grid.
        shapes = [(8, 128), (5, 37), (160, 1000)]
        for shp, k in zip(shapes, jax.random.split(key, len(shapes))):
            speeds_eval = jax.random.uniform(k, shp, dtype=jnp.float32,
                                             minval=-5.0, maxval=110.0)
            origin, lat_radius, long_radius = model(speeds_eval)
            jax.block_until_ready((origin, lat_radius, long_radius))

            assert origin.shape == shp + (2,)
            assert lat_radius.shape == shp
            assert long_radius.shape == shp

            sp_np = np.asarray(jax.device_get(speeds_eval), dtype=np.float32)
            ref_origin, ref_lat, ref_long = _ref_forward(sp_np, ref_tables)
            np.testing.assert_allclose(np.asarray(origin), ref_origin,
                                       rtol=2e-4, atol=2e-4,
                                       err_msg=f"{name} origin {shp}")
            np.testing.assert_allclose(np.asarray(lat_radius), ref_lat,
                                       rtol=2e-4, atol=2e-4,
                                       err_msg=f"{name} lat_radius {shp}")
            np.testing.assert_allclose(np.asarray(long_radius), ref_long,
                                       rtol=2e-4, atol=2e-4,
                                       err_msg=f"{name} long_radius {shp}")

    print("KERNEL_OK")
</pallas_src>

<mosaic_0001>
module attributes {stable_mosaic.version = 11 : i64} {
  func.func @_dynamics_kernel_shared(%arg0: i32, %arg1: memref<1x1024xf32, #tpu.memory_space<vmem>>, %arg2: memref<1x1024xf32, #tpu.memory_space<vmem>>, %arg3: memref<1x1024xf32, #tpu.memory_space<vmem>>, %arg4: memref<1x1024xf32, #tpu.memory_space<vmem>>) attributes {dimension_semantics = [#tpu.dimension_semantics<parallel>], iteration_bounds = array<i64: 1>, scalar_prefetch = 0 : i64, scratch_operands = 0 : i64, tpu.core_type = #tpu.core_type<tc>, window_params = [{transform_indices = @transform_0, window_bounds = array<i64: 1, 1024>}, {transform_indices = @transform_1, window_bounds = array<i64: 1, 1024>}, {transform_indices = @transform_2, window_bounds = array<i64: 1, 1024>}, {transform_indices = @transform_3, window_bounds = array<i64: 1, 1024>}]} {
    %c0 = arith.constant 0 : index
    %c0_0 = arith.constant 0 : index
    %0 = vector.load %arg1[%c0, %c0_0] : memref<1x1024xf32, #tpu.memory_space<vmem>>, vector<1x1024xf32>
    %cst = arith.constant 14.2857141 : f32
    %1 = vector.broadcast %cst : f32 to vector<1x1024xf32>
    %2 = arith.cmpf ogt, %0, %1 : vector<1x1024xf32>
    %cst_1 = arith.constant 28.5714283 : f32
    %3 = vector.broadcast %cst_1 : f32 to vector<1x1024xf32>
    %4 = arith.cmpf ogt, %0, %3 : vector<1x1024xf32>
    %cst_2 = arith.constant 42.8571434 : f32
    %5 = vector.broadcast %cst_2 : f32 to vector<1x1024xf32>
    %6 = arith.cmpf ogt, %0, %5 : vector<1x1024xf32>
    %cst_3 = arith.constant 57.1428566 : f32
    %7 = vector.broadcast %cst_3 : f32 to vector<1x1024xf32>
    %8 = arith.cmpf ogt, %0, %7 : vector<1x1024xf32>
    %cst_4 = arith.constant 71.4285736 : f32
    %9 = vector.broadcast %cst_4 : f32 to vector<1x1024xf32>
    %10 = arith.cmpf ogt, %0, %9 : vector<1x1024xf32>
    %cst_5 = arith.constant 85.7142868 : f32
    %11 = vector.broadcast %cst_5 : f32 to vector<1x1024xf32>
    %12 = arith.cmpf ogt, %0, %11 : vector<1x1024xf32>
    %cst_6 = arith.constant -7.000000e-02 : f32
    %cst_7 = arith.constant -0.069999963 : f32
    %13 = vector.broadcast %cst_6 : f32 to vector<1x1024xf32>
    %14 = vector.broadcast %cst_7 : f32 to vector<1x1024xf32>
    %15 = arith.select %2, %13, %14 : vector<1x1024xi1>, vector<1x1024xf32>
    %cst_8 = arith.constant -9.000000e+00 : f32
    %cst_9 = arith.constant -9.000000e+00 : f32
    %16 = vector.broadcast %cst_8 : f32 to vector<1x1024xf32>
    %17 = vector.broadcast %cst_9 : f32 to vector<1x1024xf32>
    %18 = arith.select %2, %16, %17 : vector<1x1024xi1>, vector<1x1024xf32>
    %cst_10 = arith.constant -0.069999963 : f32
    %19 = vector.broadcast %cst_10 : f32 to vector<1x1024xf32>
    %20 = arith.select %4, %19, %15 : vector<1x1024xi1>, vector<1x1024xf32>
    %cst_11 = arith.constant -9.000000e+00 : f32
    %21 = vector.broadcast %cst_11 : f32 to vector<1x1024xf32>
    %22 = arith.select %4, %21, %18 : vector<1x1024xi1>, vector<1x1024xf32>
    %cst_12 = arith.constant -0.0700000077 : f32
    %23 = vector.broadcast %cst_12 : f32 to vector<1x1024xf32>
    %24 = arith.select %6, %23, %20 : vector<1x1024xi1>, vector<1x1024xf32>
    %cst_13 = arith.constant -8.99999904 : f32
    %25 = vector.broadcast %cst_13 : f32 to vector<1x1024xf32>
    %26 = arith.select %6, %25, %22 : vector<1x1024xi1>, vector<1x1024xf32>
    %cst_14 = arith.constant -0.0700000897 : f32
    %27 = vector.broadcast %cst_14 : f32 to vector<1x1024xf32>
    %28 = arith.select %8, %27, %24 : vector<1x1024xi1>, vector<1x1024xf32>
    %cst_15 = arith.constant -8.99999427 : f32
    %29 = vector.broadcast %cst_15 : f32 to vector<1x1024xf32>
    %30 = arith.select %8, %29, %26 : vector<1x1024xi1>, vector<1x1024xf32>
    %cst_16 = arith.constant -0.0699999928 : f32
    %31 = vector.broadcast %cst_16 : f32 to vector<1x1024xf32>
    %32 = arith.select %10, %31, %28 : vector<1x1024xi1>, vector<1x1024xf32>
    %cst_17 = arith.constant -9.0000019 : f32
    %33 = vector.broadcast %cst_17 : f32 to vector<1x1024xf32>
    %34 = arith.select %10, %33, %30 : vector<1x1024xi1>, vector<1x1024xf32>
    %cst_18 = arith.constant -0.0699999928 : f32
    %35 = vector.broadcast %cst_18 : f32 to vector<1x1024xf32>
    %36 = arith.select %12, %35, %32 : vector<1x1024xi1>, vector<1x1024xf32>
    %cst_19 = arith.constant -9.0000019 : f32
    %37 = vector.broadcast %cst_19 : f32 to vector<1x1024xf32>
    %38 = arith.select %12, %37, %34 : vector<1x1024xi1>, vector<1x1024xf32>
    %39 = arith.mulf %0, %36 : vector<1x1024xf32>
    %40 = arith.addf %39, %38 : vector<1x1024xf32>
    %c0_20 = arith.constant 0 : index
    %c0_21 = arith.constant 0 : index
    %41 = vector.load %arg2[%c0_20, %c0_21] : memref<1x1024xf32, #tpu.memory_space<vmem>>, vector<1x1024xf32>
    tpu.vector_store %arg2[%c0_20, %c0_21], %40 {strides = array<i32>} : memref<1x1024xf32, #tpu.memory_space<vmem>>, vector<1x1024xf32>,
    %cst_22 = arith.constant -0.0399999805 : f32
    %cst_23 = arith.constant -0.0399999805 : f32
    %42 = vector.broadcast %cst_22 : f32 to vector<1x1024xf32>
    %43 = vector.broadcast %cst_23 : f32 to vector<1x1024xf32>
    %44 = arith.select %2, %42, %43 : vector<1x1024xi1>, vector<1x1024xf32>
    %cst_24 = arith.constant 2.500000e+01 : f32
    %cst_25 = arith.constant 2.500000e+01 : f32
    %45 = vector.broadcast %cst_24 : f32 to vector<1x1024xf32>
    %46 = vector.broadcast %cst_25 : f32 to vector<1x1024xf32>
    %47 = arith.select %2, %45, %46 : vector<1x1024xi1>, vector<1x1024xf32>
    %cst_26 = arith.constant -0.0399999805 : f32
    %48 = vector.broadcast %cst_26 : f32 to vector<1x1024xf32>
    %49 = arith.select %4, %48, %44 : vector<1x1024xi1>, vector<1x1024xf32>
    %cst_27 = arith.constant 2.500000e+01 : f32
    %50 = vector.broadcast %cst_27 : f32 to vector<1x1024xf32>
    %51 = arith.select %4, %50, %47 : vector<1x1024xi1>, vector<1x1024xf32>
    %cst_28 = arith.constant -0.0399999842 : f32
    %52 = vector.broadcast %cst_28 : f32 to vector<1x1024xf32>
    %53 = arith.select %6, %52, %49 : vector<1x1024xi1>, vector<1x1024xf32>
    %cst_29 = arith.constant 2.500000e+01 : f32
    %54 = vector.broadcast %cst_29 : f32 to vector<1x1024xf32>
    %55 = arith.select %6, %54, %51 : vector<1x1024xi1>, vector<1x1024xf32>
    %cst_30 = arith.constant -0.0400001071 : f32
    %56 = vector.broadcast %cst_30 : f32 to vector<1x1024xf32>
    %57 = arith.select %8, %56, %53 : vector<1x1024xi1>, vector<1x1024xf32>
    %cst_31 = arith.constant 25.0000076 : f32
    %58 = vector.broadcast %cst_31 : f32 to vector<1x1024xf32>
    %59 = arith.select %8, %58, %55 : vector<1x1024xi1>, vector<1x1024xf32>
    %cst_32 = arith.constant -0.0399999842 : f32
    %60 = vector.broadcast %cst_32 : f32 to vector<1x1024xf32>
    %61 = arith.select %10, %60, %57 : vector<1x1024xi1>, vector<1x1024xf32>
    %cst_33 = arith.constant 24.9999981 : f32
    %62 = vector.broadcast %cst_33 : f32 to vector<1x1024xf32>
    %63 = arith.select %10, %62, %59 : vector<1x1024xi1>, vector<1x1024xf32>
    %cst_34 = arith.constant -0.0399999842 : f32
    %64 = vector.broadcast %cst_34 : f32 to vector<1x1024xf32>
    %65 = arith.select %12, %64, %61 : vector<1x1024xi1>, vector<1x1024xf32>
    %cst_35 = arith.constant 24.9999981 : f32
    %66 = vector.broadcast %cst_35 : f32 to vector<1x1024xf32>
    %67 = arith.select %12, %66, %63 : vector<1x1024xi1>, vector<1x1024xf32>
    %68 = arith.mulf %0, %65 : vector<1x1024xf32>
    %69 = arith.addf %68, %67 : vector<1x1024xf32>
    %c0_36 = arith.constant 0 : index
    %c0_37 = arith.constant 0 : index
    %70 = vector.load %arg3[%c0_36, %c0_37] : memref<1x1024xf32, #tpu.memory_space<vmem>>, vector<1x1024xf32>
    tpu.vector_store %arg3[%c0_36, %c0_37], %69 {strides = array<i32>} : memref<1x1024xf32, #tpu.memory_space<vmem>>, vector<1x1024xf32>,
    %cst_38 = arith.constant 0.00999996066 : f32
    %cst_39 = arith.constant 0.00999999418 : f32
    %71 = vector.broadcast %cst_38 : f32 to vector<1x1024xf32>
    %72 = vector.broadcast %cst_39 : f32 to vector<1x1024xf32>
    %73 = arith.select %2, %71, %72 : vector<1x1024xi1>, vector<1x1024xf32>
    %cst_40 = arith.constant 2.100000e+01 : f32
    %cst_41 = arith.constant 2.100000e+01 : f32
    %74 = vector.broadcast %cst_40 : f32 to vector<1x1024xf32>
    %75 = vector.broadcast %cst_41 : f32 to vector<1x1024xf32>
    %76 = arith.select %2, %74, %75 : vector<1x1024xi1>, vector<1x1024xf32>
    %cst_42 = arith.constant 0.00999999605 : f32
    %77 = vector.broadcast %cst_42 : f32 to vector<1x1024xf32>
    %78 = arith.select %4, %77, %73 : vector<1x1024xi1>, vector<1x1024xf32>
    %cst_43 = arith.constant 2.100000e+01 : f32
    %79 = vector.broadcast %cst_43 : f32 to vector<1x1024xf32>
    %80 = arith.select %4, %79, %76 : vector<1x1024xi1>, vector<1x1024xf32>
    %cst_44 = arith.constant 0.00999996252 : f32
    %81 = vector.broadcast %cst_44 : f32 to vector<1x1024xf32>
    %82 = arith.select %6, %81, %78 : vector<1x1024xi1>, vector<1x1024xf32>
    %cst_45 = arith.constant 2.100000e+01 : f32
    %83 = vector.broadcast %cst_45 : f32 to vector<1x1024xf32>
    %84 = arith.select %6, %83, %80 : vector<1x1024xi1>, vector<1x1024xf32>
    %cst_46 = arith.constant 0.0100001264 : f32
    %85 = vector.broadcast %cst_46 : f32 to vector<1x1024xf32>
    %86 = arith.select %8, %85, %82 : vector<1x1024xi1>, vector<1x1024xf32>
    %cst_47 = arith.constant 20.9999905 : f32
    %87 = vector.broadcast %cst_47 : f32 to vector<1x1024xf32>
    %88 = arith.select %8, %87, %84 : vector<1x1024xi1>, vector<1x1024xf32>
    %cst_48 = arith.constant 0.00999997928 : f32
    %89 = vector.broadcast %cst_48 : f32 to vector<1x1024xf32>
    %90 = arith.select %10, %89, %86 : vector<1x1024xi1>, vector<1x1024xf32>
    %cst_49 = arith.constant 21.0000019 : f32
    %91 = vector.broadcast %cst_49 : f32 to vector<1x1024xf32>
    %92 = arith.select %10, %91, %88 : vector<1x1024xi1>, vector<1x1024xf32>
    %cst_50 = arith.constant 0.00999997928 : f32
    %93 = vector.broadcast %cst_50 : f32 to vector<1x1024xf32>
    %94 = arith.select %12, %93, %90 : vector<1x1024xi1>, vector<1x1024xf32>
    %cst_51 = arith.constant 21.0000019 : f32
    %95 = vector.broadcast %cst_51 : f32 to vector<1x1024xf32>
    %96 = arith.select %12, %95, %92 : vector<1x1024xi1>, vector<1x1024xf32>
    %97 = arith.mulf %0, %94 : vector<1x1024xf32>
    %98 = arith.addf %97, %96 : vector<1x1024xf32>
    %c0_52 = arith.constant 0 : index
    %c0_53 = arith.constant 0 : index
    %99 = vector.load %arg4[%c0_52, %c0_53] : memref<1x1024xf32, #tpu.memory_space<vmem>>, vector<1x1024xf32>
    tpu.vector_store %arg4[%c0_52, %c0_53], %98 {strides = array<i32>} : memref<1x1024xf32, #tpu.memory_space<vmem>>, vector<1x1024xf32>,
    return
  }
  func.func @transform_0(%arg0: i32) -> (i32, i32) {
    %c0_i32 = arith.constant 0 : i32
    %c0_i32_0 = arith.constant 0 : i32
    return %arg0, %c0_i32 : i32, i32
  }
  func.func @transform_1(%arg0: i32) -> (i32, i32) {
    %c0_i32 = arith.constant 0 : i32
    %c0_i32_0 = arith.constant 0 : i32
    return %arg0, %c0_i32 : i32, i32
  }
  func.func @transform_2(%arg0: i32) -> (i32, i32) {
    %c0_i32 = arith.constant 0 : i32
    %c0_i32_0 = arith.constant 0 : i32
    return %arg0, %c0_i32 : i32, i32
  }
  func.func @transform_3(%arg0: i32) -> (i32, i32) {
    %c0_i32 = arith.constant 0 : i32
    %c0_i32_0 = arith.constant 0 : i32
    return %arg0, %c0_i32 : i32, i32
  }
}

</mosaic_0001>

<llo_original>
// kernel: _forward_impl.1
$region0: #{_forward_impl.1}
  #allocation0 [shape = 'u32[]', space=smem, size = 0x4, offset = 0x4, fixed_abs, tag = 'smem constant byte address 0x4 - core index']
  #allocation1 [shape = 'u32[144,128]{1,0:T(1,128)}', space=vmem, size = 0x12000, scoped, tag = 'internal scratch']
  %s0 = inlined_call_operand.hbm [shape: f32[1,1024], index: 0, kind: input, shape index: {}]
  %s1 = inlined_call_operand.vmem [shape: f32[1,1024], index: 1, kind: output, shape index: {0}]
  %s2 = inlined_call_operand.hbm [shape: f32[1,1024], index: 2, kind: output, shape index: {1}]
  %s3 = inlined_call_operand.hbm [shape: f32[1,1024], index: 3, kind: output, shape index: {2}]
  %4 = xla_tuple %s1, %s2, %s3
  %s5 = sld [smem:[#allocation0]]
  $region34: #{_forward_impl.1} parent=0
    _
  %s7 = ssub.s32 1, %s5
  %s8 = scalar_select 0, %s7, %s5
  $region1: #{_forward_impl.1} parent=0
    #allocation2 [shape = 'u8[4096]{0}', space=vmem, size = 0x1000, scoped, tag = 'input window, operand 0, single buffered']
    #allocation3 [shape = 's32[1]{0}', space=sflag, size = 0x4, scoped, tag = 'scoped memory for _forward_impl.1']
    #allocation4 [shape = 's32[1]{0}', space=sflag, size = 0x4, scoped, tag = 'scoped memory for _forward_impl.1']
    #allocation5 [shape = 'u8[4096]{0}', space=vmem, size = 0x1000, scoped, tag = 'output window, operand 1, single buffered']
    #allocation6 [shape = 'u8[4096]{0}', space=vmem, size = 0x1000, scoped, tag = 'output window, operand 2, single buffered']
    #allocation7 [shape = 's32[1]{0}', space=sflag, size = 0x4, scoped, tag = 'scoped memory for _forward_impl.1']
    %9 = vsyncpa [#allocation3], 0
    %10 = vsyncpa [#allocation4], 0
    %11 = vsyncpa [#allocation7], 0
    // Predicated region
    $region2: #{_forward_impl.1} parent=1 // pred_check
      _
    $region3: #{_forward_impl.1} parent=1 // pred_check_branch
      %13 = sbr.rel (0) target = $region5
    $region4: #{_forward_impl.1} parent=1 // pred_region
      %s15 = ssub.s32 128, 128
      %16 = vsyncadd [#allocation3], %s15
      %s18 = sshll.u32 [#allocation2], 4
      %s19 = int_to_ptr.vmem [resolvable:$true] %s18
      %21 = dma.hbm_to_vmem [thread:$0]  %s0, 128, %s19, [#allocation3]
    $region5: #{_forward_impl.1} parent=1 // pred_fallthru
      _
    // Predicated region
    $region6: #{_forward_impl.1} parent=1 // pred_check
      _
    $region7: #{_forward_impl.1} parent=1 // pred_check_branch
      %23 = sbr.rel (0) target = $region9
    $region8: #{_forward_impl.1} parent=1 // pred_region
      %24 = dma.done [#allocation3], 128
    $region9: #{_forward_impl.1} parent=1 // pred_fallthru
      _
    %v25 = vld [vmem:[#allocation2] sm:$0xff]
    %vm26 = vcmp.gt.f32.partialorder %v25, 14.285714
    %vm27 = vcmp.gt.f32.partialorder %v25, 28.571428
    %vm28 = vcmp.gt.f32.partialorder %v25, 42.857143
    %vm29 = vcmp.gt.f32.partialorder %v25, 57.142857
    %vm30 = vcmp.gt.f32.partialorder %v25, 71.42857
    %vm31 = vcmp.gt.f32.partialorder %v25, 85.71429
    %v32 = vsel %vm26, -0.07, -0.06999996
    %v33 = vsel %vm27, -0.06999996, %v32
    %v34 = vsel %vm28, -0.07000001, %v33
    %v35 = vsel %vm28, -8.999999, -9.0
    %v36 = vsel %vm29, -0.07000009, %v34
    %v37 = vsel %vm29, -8.999994, %v35
    %v38 = vsel %vm30, -0.06999999, %v36
    %v39 = vsel %vm30, -9.000002, %v37
    %v40 = vsel %vm31, -0.06999999, %v38
    %v41 = vsel %vm31, -9.000002, %v39
    %v42 = vmul.f32 %v25, %v40
    %v43 = vadd.f32 %v42, %v41
    %44 = vst [vmem:[%s1] sm:$0xff] %v43
    %v45 = vsel %vm28, -0.039999984, -0.03999998
    %v46 = vsel %vm29, -0.040000107, %v45
    %v47 = vsel %vm29, 25.000008, 25.0
    %v48 = vsel %vm30, -0.039999984, %v46
    %v49 = vsel %vm30, 24.999998, %v47
    %v50 = vsel %vm31, -0.039999984, %v48
    %v51 = vsel %vm31, 24.999998, %v49
    %v52 = vmul.f32 %v25, %v50
    %v53 = vadd.f32 %v52, %v51
    %54 = vst [vmem:[#allocation5] sm:$0xff] %v53
    %v55 = vsel %vm26, 0.009999961, 0.009999994
    %v56 = vsel %vm27, 0.009999996, %v55
    %v57 = vsel %vm28, 0.0099999625, %v56
    %v58 = vsel %vm29, 0.010000126, %v57
    %v59 = vsel %vm29, 20.99999, 21.0
    %v60 = vsel %vm30, 0.009999979, %v58
    %v61 = vsel %vm30, 21.000002, %v59
    %v62 = vsel %vm31, 0.009999979, %v60
    %v63 = vsel %vm31, 21.000002, %v61
    %v64 = vmul.f32 %v25, %v62
    %v65 = vadd.f32 %v64, %v63
    %66 = vst [vmem:[#allocation6] sm:$0xff] %v65
    // Predicated region
    $region10: #{_forward_impl.1} parent=1 // pred_check
      _
    $region11: #{_forward_impl.1} parent=1 // pred_check_branch
      %68 = sbr.rel (0) target = $region13
    $region12: #{_forward_impl.1} parent=1 // pred_region
      _
    $region13: #{_forward_impl.1} parent=1 // pred_fallthru
      _
    // Predicated region
    $region14: #{_forward_impl.1} parent=1 // pred_check
      _
    $region15: #{_forward_impl.1} parent=1 // pred_check_branch
      %70 = sbr.rel (0) target = $region17
    $region16: #{_forward_impl.1} parent=1 // pred_region
      %s72 = ssub.s32 128, 128
      %73 = vsyncadd [#allocation4], %s72
      %s75 = sshll.u32 [#allocation5], 4
      %s76 = int_to_ptr.vmem [resolvable:$true] %s75
      %78 = dma.vmem_to_hbm [thread:$0]  %s76, 128, %s2, [#allocation4]
    $region17: #{_forward_impl.1} parent=1 // pred_fallthru
      _
    // Predicated region
    $region18: #{_forward_impl.1} parent=1 // pred_check
      _
    $region19: #{_forward_impl.1} parent=1 // pred_check_branch
      %80 = sbr.rel (0) target = $region21
    $region20: #{_forward_impl.1} parent=1 // pred_region
      %s82 = ssub.s32 128, 128
      %83 = vsyncadd [#allocation7], %s82
      %s85 = sshll.u32 [#allocation6], 4
      %s86 = int_to_ptr.vmem [resolvable:$true] %s85
      %88 = dma.vmem_to_hbm [thread:$0]  %s86, 128, %s3, [#allocation7]
    $region21: #{_forward_impl.1} parent=1 // pred_fallthru
      _
    // Predicated region
    $region22: #{_forward_impl.1} parent=1 // pred_check
      _
    $region23: #{_forward_impl.1} parent=1 // pred_check_branch
      %90 = sbr.rel (0) target = $region25
    $region24: #{_forward_impl.1} parent=1 // pred_region
      _
    $region25: #{_forward_impl.1} parent=1 // pred_fallthru
      _
    // Predicated region
    $region26: #{_forward_impl.1} parent=1 // pred_check
      _
    $region27: #{_forward_impl.1} parent=1 // pred_check_branch
      %92 = sbr.rel (0) target = $region29
    $region28: #{_forward_impl.1} parent=1 // pred_region
      %93 = dma.done [#allocation4], 128
    $region29: #{_forward_impl.1} parent=1 // pred_fallthru
      _
    // Predicated region
    $region30: #{_forward_impl.1} parent=1 // pred_check
      _
    $region31: #{_forward_impl.1} parent=1 // pred_check_branch
      %95 = sbr.rel (0) target = $region33
    $region32: #{_forward_impl.1} parent=1 // pred_region
      %96 = dma.done [#allocation7], 128
    $region33: #{_forward_impl.1} parent=1 // pred_fallthru
      _
    %97 = vsyncpa [#allocation3], 1
    %98 = vsyncpa [#allocation4], 1
    %99 = vsyncpa [#allocation7], 1

</llo_original>
